<compile_context>
chip_gen: v7x
topology: tpu7x:2x2x1
jax: 0.10.0
libtpu: 0.0.40
codegen_flags: <defaults>
</compile_context>

<pallas_src>
import jax
import jax.numpy as jnp
from jax.experimental import pallas as pl
from jax.experimental.pallas import tpu as pltpu


def make_encoding(n_seq: int, in_dim: int) -> jnp.ndarray:
    """Sinusoidal table, identical math to the PyTorch PosEncoding.__init__."""
    assert in_dim % 2 == 0, "PosEncoding (like the torch module) assumes even in_dim"
    positions = jnp.arange(n_seq, dtype=jnp.float32)                         # [n_seq]
    frequencies = 10000.0 ** (
        jnp.arange(0, in_dim, 2, dtype=jnp.float32) / float(in_dim))         # [in_dim//2]
    angles = positions[:, None] / frequencies[None, :]                       # [n_seq, in_dim//2]
    enc = jnp.zeros((n_seq, in_dim), dtype=jnp.float32)
    enc = enc.at[:, 0::2].set(jnp.sin(angles))
    enc = enc.at[:, 1::2].set(jnp.cos(angles))
    return enc


def _pos_enc_kernel(x_ref, enc_ref, o_ref):
    # x_ref:   [tb, R]  rows of the flattened [b, n_seq*in_dim] activation view
    # enc_ref: [1,  R]  flattened encoding table, VMEM-resident across the grid
    # o_ref:   [tb, R]
    # (1, R) broadcasts over the row (sublane) axis -> straight vld/vadd/vst stream.
    o_ref[...] = x_ref[...] + enc_ref[...]


def _choose_row_tile(b: int, row_bytes: int, *, target_bytes: int = 2 << 20) -> int:
    """Rows per block: ~target_bytes per tile; >=2 grid steps for large tensors (v7x 2 TCs)."""
    tb = max(1, min(b, target_bytes // max(row_bytes, 1)))
    if b >= 2 and b * row_bytes > (8 << 20):
        tb = min(tb, max(1, b // 2))   # keep both v7x TensorCores busy on big inputs
    if tb >= b:
        return b                       # full dim -> always a legal block shape
    if tb >= 8:
        tb -= tb % 8                   # keep the second-minor (sublane) dim aligned
    return tb


def pos_encoding(x: jnp.ndarray, encoding: jnp.ndarray) -> jnp.ndarray:
    """x: [b, n_seq, in_dim]; encoding: [n_seq, in_dim] -> x + encoding (broadcast over b)."""
    b, n_seq, in_dim = x.shape
    assert encoding.shape == (n_seq, in_dim)

    row = n_seq * in_dim
    itemsize = jnp.dtype(x.dtype).itemsize

    # Lane-dense 2-D views: trailing dim = n_seq*in_dim (256 even for the tiny demo).
    x2 = x.reshape(b, row)
    enc2 = encoding.astype(x.dtype).reshape(1, row)   # host-side cast: no mixed-dtype add

    tb = _choose_row_tile(b, row * itemsize)
    grid = (pl.cdiv(b, tb),)

    tile_bytes = tb * row * itemsize
    enc_bytes = row * itemsize
    # in + out double-buffered, resident table, plus headroom; well under v7x's 64 MiB VMEM.
    vmem_limit = int(min(max(4 * tile_bytes + 2 * enc_bytes + (2 << 20), 16 << 20),
                         48 << 20))

    out2 = pl.pallas_call(
        _pos_enc_kernel,
        out_shape=jax.ShapeDtypeStruct((b, row), x.dtype),
        grid=grid,
        in_specs=[
            pl.BlockSpec((tb, row), lambda i: (i, 0)),
            pl.BlockSpec((1, row), lambda i: (0, 0)),   # same block every step -> resident
        ],
        out_specs=pl.BlockSpec((tb, row), lambda i: (i, 0)),
        compiler_params=pltpu.CompilerParams(
            dimension_semantics=("parallel",),
            vmem_limit_bytes=vmem_limit,
        ),
    )(x2, enc2)

    return out2.reshape(b, n_seq, in_dim)


if __name__ == "__main__":
    b_size, n_seq, in_dim = 2, 8, 32

    key = jax.random.PRNGKey(0)
    x = jax.random.normal(key, (b_size, n_seq, in_dim), dtype=jnp.float32)

    encoding = make_encoding(n_seq, in_dim)

    out = jax.block_until_ready(pos_encoding(x, encoding))

    # Reference check against plain-JAX broadcast add (same semantics as the torch module).
    ref = x + encoding[None, :, :]
    assert out.shape == (b_size, n_seq, in_dim)
    assert jnp.allclose(out, ref, atol=1e-6), "mismatch vs reference"

    print("KERNEL_OK")
</pallas_src>

<mosaic_0001>
module attributes {stable_mosaic.version = 11 : i64} {
  func.func @_pos_enc_kernel(%arg0: i32, %arg1: memref<2x256xf32, #tpu.memory_space<vmem>>, %arg2: memref<1x256xf32, #tpu.memory_space<vmem>>, %arg3: memref<2x256xf32, #tpu.memory_space<vmem>>) attributes {dimension_semantics = [#tpu.dimension_semantics<parallel>], iteration_bounds = array<i64: 1>, scalar_prefetch = 0 : i64, scratch_operands = 0 : i64, tpu.core_type = #tpu.core_type<tc>, window_params = [{transform_indices = @transform_0, window_bounds = array<i64: 2, 256>}, {pipeline_mode = #tpu.pipeline_mode<synchronous>, transform_indices = @transform_1, window_bounds = array<i64: 1, 256>}, {transform_indices = @transform_2, window_bounds = array<i64: 2, 256>}]} {
    %c0 = arith.constant 0 : index
    %c0_0 = arith.constant 0 : index
    %0 = vector.load %arg1[%c0, %c0_0] : memref<2x256xf32, #tpu.memory_space<vmem>>, vector<2x256xf32>
    %c0_1 = arith.constant 0 : index
    %c0_2 = arith.constant 0 : index
    %1 = vector.load %arg2[%c0_1, %c0_2] : memref<1x256xf32, #tpu.memory_space<vmem>>, vector<1x256xf32>
    %2 = vector.broadcast %1 : vector<1x256xf32> to vector<2x256xf32>
    %3 = arith.addf %0, %2 : vector<2x256xf32>
    %c0_3 = arith.constant 0 : index
    %c0_4 = arith.constant 0 : index
    %4 = vector.load %arg3[%c0_3, %c0_4] : memref<2x256xf32, #tpu.memory_space<vmem>>, vector<2x256xf32>
    tpu.vector_store %arg3[%c0_3, %c0_4], %3 {strides = array<i32>} : memref<2x256xf32, #tpu.memory_space<vmem>>, vector<2x256xf32>,
    return
  }
  func.func @transform_0(%arg0: i32) -> (i32, i32) {
    %c0_i32 = arith.constant 0 : i32
    %c0_i32_0 = arith.constant 0 : i32
    return %arg0, %c0_i32 : i32, i32
  }
  func.func @transform_1(%arg0: i32) -> (i32, i32) {
    %c0_i32 = arith.constant 0 : i32
    %c0_i32_0 = arith.constant 0 : i32
    %c0_i32_1 = arith.constant 0 : i32
    return %c0_i32, %c0_i32_0 : i32, i32
  }
  func.func @transform_2(%arg0: i32) -> (i32, i32) {
    %c0_i32 = arith.constant 0 : i32
    %c0_i32_0 = arith.constant 0 : i32
    return %arg0, %c0_i32 : i32, i32
  }
}

</mosaic_0001>

<llo_original>
// kernel: tpu_custom_call.1
$region0: #{tpu_custom_call.1}
  #allocation0 [shape = 'u32[]', space=smem, size = 0x4, offset = 0x4, fixed_abs, tag = 'smem constant byte address 0x4 - core index']
  #allocation1 [shape = 'u32[144,128]{1,0:T(1,128)}', space=vmem, size = 0x12000, scoped, tag = 'internal scratch']
  %s0 = inlined_call_operand.hbm [shape: f32[2,256], index: 0, kind: input, shape index: {}]
  %s1 = inlined_call_operand.vmem [shape: f32[1,256], index: 1, kind: input, shape index: {}]
  %s2 = inlined_call_operand.hbm [shape: f32[2,256], index: 2, kind: output, shape index: {}]
  %s3 = sld [smem:[#allocation0]]
  $region22: #{tpu_custom_call.1} parent=0
    _
  %s5 = ssub.s32 1, %s3
  %s6 = scalar_select 0, %s5, %s3
  $region1: #{tpu_custom_call.1} parent=0
    #allocation2 [shape = 'u8[2048]{0}', space=vmem, size = 0x800, scoped, tag = 'input window, operand 0, single buffered']
    #allocation3 [shape = 's32[1]{0}', space=sflag, size = 0x4, scoped, tag = 'scoped memory for tpu_custom_call.1']
    #allocation4 [shape = 's32[1]{0}', space=sflag, size = 0x4, scoped, tag = 'scoped memory for tpu_custom_call.1']
    #allocation5 [shape = 'u8[2048]{0}', space=vmem, size = 0x800, scoped, tag = 'output window, operand 0, single buffered']
    %7 = vsyncpa [#allocation3], 0
    %8 = vsyncpa [#allocation4], 0
    // Predicated region
    $region2: #{tpu_custom_call.1} parent=1 // pred_check
      _
    $region3: #{tpu_custom_call.1} parent=1 // pred_check_branch
      %10 = sbr.rel (0) target = $region5
    $region4: #{tpu_custom_call.1} parent=1 // pred_region
      %s12 = ssub.s32 64, 64
      %13 = vsyncadd [#allocation3], %s12
      %s15 = sshll.u32 [#allocation2], 4
      %s16 = int_to_ptr.vmem [resolvable:$true] %s15
      %18 = dma.hbm_to_vmem [thread:$0]  %s0, 64, %s16, [#allocation3]
    $region5: #{tpu_custom_call.1} parent=1 // pred_fallthru
      _
    // Predicated region
    $region6: #{tpu_custom_call.1} parent=1 // pred_check
      _
    $region7: #{tpu_custom_call.1} parent=1 // pred_check_branch
      %20 = sbr.rel (0) target = $region9
    $region8: #{tpu_custom_call.1} parent=1 // pred_region
      _
    $region9: #{tpu_custom_call.1} parent=1 // pred_fallthru
      _
    // Predicated region
    $region10: #{tpu_custom_call.1} parent=1 // pred_check
      _
    $region11: #{tpu_custom_call.1} parent=1 // pred_check_branch
      %22 = sbr.rel (0) target = $region13
    $region12: #{tpu_custom_call.1} parent=1 // pred_region
      %23 = dma.done [#allocation3], 64
    $region13: #{tpu_custom_call.1} parent=1 // pred_fallthru
      _
    %v24 = vld [vmem:[#allocation2] sm:$0xf]
    %v25 = vld [vmem:[%s1] sm:$0x3]
    %v27 = vlaneseq
    %v28 = vshrl.u32 %v27, 7
    %v29 = vsub.s32 0, %v28
    %v30 = vrot.slane %v25, %v29
    %v31 = vlaneseq
    %v32 = vshrl.u32 %v31, 7
    %v33 = vsub.s32 1, %v32
    %v34 = vrot.slane %v25, %v33
    %v35 = vcombine.low %v30, %v34
    %v37 = vunpack.c.l.s4 1983009808
    %v38 = vunpack.c.0.s8 %v37
    %v39 = vlaneseq
    %v40 = vshrl.u32 %v39, 7
    %v41 = vsub.s32 %v38, %v40
    %v42 = vrot.slane %v35, %v41
    %v44 = vadd.f32 %v24, %v42
    %45 = vst [vmem:[#allocation5] sm:$0xf] %v44
    // Predicated region
    $region14: #{tpu_custom_call.1} parent=1 // pred_check
      _
    $region15: #{tpu_custom_call.1} parent=1 // pred_check_branch
      %47 = sbr.rel (0) target = $region17
    $region16: #{tpu_custom_call.1} parent=1 // pred_region
      %s49 = ssub.s32 64, 64
      %50 = vsyncadd [#allocation4], %s49
      %s52 = sshll.u32 [#allocation5], 4
      %s53 = int_to_ptr.vmem [resolvable:$true] %s52
      %55 = dma.vmem_to_hbm [thread:$0]  %s53, 64, %s2, [#allocation4]
    $region17: #{tpu_custom_call.1} parent=1 // pred_fallthru
      _
    // Predicated region
    $region18: #{tpu_custom_call.1} parent=1 // pred_check
      _
    $region19: #{tpu_custom_call.1} parent=1 // pred_check_branch
      %57 = sbr.rel (0) target = $region21
    $region20: #{tpu_custom_call.1} parent=1 // pred_region
      %58 = dma.done [#allocation4], 64
    $region21: #{tpu_custom_call.1} parent=1 // pred_fallthru
      _
    %59 = vsyncpa [#allocation3], 1
    %60 = vsyncpa [#allocation4], 1

</llo_original>
